<compile_context>
chip_gen: v7x
topology: tpu7x:2x2x1
jax: 0.10.0
libtpu: 0.0.40
codegen_flags: <defaults>
</compile_context>

<pallas_src>
import functools

import jax
import jax.numpy as jnp
from jax.experimental import pallas as pl
from jax.experimental.pallas import tpu as pltpu

BINS = 10
BINS_PAD = 16          # bins padded to a sublane multiple for a clean layout
LANES = 128
SUBLANES = 8
TILE_N = 512           # <= 512 lanes/tile keeps the (16, TN) one-hot resident in vregs
NEG_LOGIT = -1e30      # padding logit (exp -> 0, arithmetic stays finite)
PAD_TARGET = 2.0       # padded lanes: g = |p - 2| >= 1 -> no bin -> weight 0


def _round_up(x, m):
    return (x + m - 1) // m * m


def ghmc_kernel(n_ref, pred_ref, target_ref, out_ref, counts_ref, acc_ref, *, bins):
    # n_ref      : (1,)          i32 SMEM scalar -- real batch size (runtime value)
    # pred_ref   : (C_pad, TN)   f32 logits tile -- classes on sublanes, batch on lanes
    # target_ref : (1, TN)       f32 target tile (padded lanes hold 2.0)
    # out_ref    : (1, 1)        f32 scalar loss
    # counts_ref : (BINS_PAD, 1) f32 VMEM scratch -- global per-bin counts
    # acc_ref    : (1, 1)        f32 VMEM scratch -- running weighted-BCE sum
    ph = pl.program_id(0)           # 0: histogram pass, 1: weighted-BCE pass
    i = pl.program_id(1)            # batch (lane) tile index
    nt = pl.num_programs(1)

    @pl.when((ph == 0) & (i == 0))
    def _init():
        counts_ref[...] = jnp.zeros_like(counts_ref)
        acc_ref[...] = jnp.zeros_like(acc_ref)
        out_ref[...] = jnp.zeros_like(out_ref)

    logits = pred_ref[...]                                        # (C_pad, TN)
    t = target_ref[...]                                           # (1, TN)
    tn = logits.shape[1]

    # ---- log-softmax over the class axis (sublanes); keep class 0 ----------
    m = jnp.max(logits, axis=0, keepdims=True)                    # (1, TN)
    e = jnp.exp(logits - m)                                       # (C_pad, TN)
    denom = jnp.sum(e, axis=0, keepdims=True)                     # (1, TN)
    inv_denom = pl.reciprocal(denom, approx=False)                # exact: bin-edge parity of p
    p = jnp.minimum(e[0:1, :] * inv_denom, 1.0)                   # (1, TN)
    g = jnp.abs(p - t)                                            # (1, TN); >= 1 on padded lanes

    # ---- single-compare one-hot histogram: bins on sublanes, batch on lanes
    bin_ids = jax.lax.broadcasted_iota(jnp.int32, (BINS_PAD, tn), 0)
    b = (g * jnp.float32(bins)).astype(jnp.int32)                 # floor(g*bins), g >= 0
    one_hot = (bin_ids == b).astype(jnp.float32)                  # (BINS_PAD, TN)

    @pl.when(ph == 0)
    def _count():
        counts_ref[...] += jnp.sum(one_hot, axis=1, keepdims=True)   # (BINS_PAD, 1)

    @pl.when(ph == 1)
    def _loss():
        tot = n_ref[0].astype(jnp.float32)
        counts = counts_ref[...]                                  # global counts (phase 0 done)
        row_ids = jax.lax.broadcasted_iota(jnp.int32, (BINS_PAD, 1), 0)
        # rows >= bins only catch g == 1.0 exactly / padded lanes -> zero them
        # to keep the reference's "last edge exclusive" semantics.
        has = (counts > 0.0) & (row_ids < bins)                   # (BINS_PAD, 1)
        w_bin = jnp.where(
            has, tot * pl.reciprocal(jnp.maximum(counts, 1.0), approx=True), 0.0)
        n_valid = jnp.sum(has.astype(jnp.float32), axis=0, keepdims=True)   # (1, 1)

        # per-element (un-normalized) bin weight: gather via one-hot * w_bin
        weights = jnp.sum(one_hot * w_bin, axis=0, keepdims=True)  # (1, TN)

        # weighted BCE on this tile (padded lanes have weight 0)
        log_p = jnp.maximum(logits[0:1, :] - m - jnp.log(denom), -100.0)
        log_1mp = jnp.maximum(jnp.log(1.0 - p), -100.0)
        bce = -(t * log_p + (1.0 - t) * log_1mp)                  # (1, TN)

        acc = acc_ref[...] + jnp.sum(weights * bce, keepdims=True)  # (1, 1)
        acc_ref[...] = acc
        # /n_valid (weights /= n) and /tot (mean) folded into one scale.
        # Written every phase-1 step; only the last tile's write survives.
        scale = pl.reciprocal(jnp.maximum(n_valid, 1.0) * tot, approx=True)
        out_ref[...] = acc * scale


@functools.partial(jax.jit, static_argnames=("bins",))
def ghmc_loss(pred, target, bins=BINS):
    """pred: (N, C) float32 logits; target: (N,) float in {0, 1}."""
    n, c = pred.shape
    assert 0 < bins <= BINS_PAD
    n_128 = _round_up(max(n, 1), LANES)
    tile_n = min(TILE_N, n_128)
    n_pad = _round_up(n_128, tile_n)
    c_pad = _round_up(max(c, 1), SUBLANES)

    # Lane-dense layout plumbing: classes on sublanes, batch on lanes.  Under
    # jit this pad+transpose fuses into one copy (it is NOT 4 separate ops).
    # Padded class rows get a huge-negative logit (exp -> 0); padded batch
    # lanes get target = 2.0 so they fall in no bin (no in-kernel mask needed).
    logits_pad = jnp.full((c_pad, n_pad), NEG_LOGIT, dtype=jnp.float32)
    logits_pad = logits_pad.at[:c, :n].set(jnp.asarray(pred, jnp.float32).T)
    target_pad = jnp.full((1, n_pad), PAD_TARGET, dtype=jnp.float32)
    target_pad = target_pad.at[0, :n].set(jnp.asarray(target, jnp.float32))
    n_smem = jnp.full((1,), n, dtype=jnp.int32)     # runtime scalar -> no recompile on n

    kernel = functools.partial(ghmc_kernel, bins=bins)
    grid = (2, n_pad // tile_n)                     # (phase, batch-lane tile)
    out = pl.pallas_call(
        kernel,
        out_shape=jax.ShapeDtypeStruct((1, 1), jnp.float32),
        grid_spec=pltpu.PrefetchScalarGridSpec(
            num_scalar_prefetch=1,
            grid=grid,
            in_specs=[
                pl.BlockSpec((c_pad, tile_n), lambda ph, i, n_ref: (0, i)),
                pl.BlockSpec((1, tile_n), lambda ph, i, n_ref: (0, i)),
            ],
            out_specs=pl.BlockSpec((1, 1), lambda ph, i, n_ref: (0, 0)),
            scratch_shapes=[
                pltpu.VMEM((BINS_PAD, 1), jnp.float32),   # global bin counts
                pltpu.VMEM((1, 1), jnp.float32),          # weighted-BCE accumulator
            ],
        ),
        compiler_params=pltpu.CompilerParams(
            # phase axis is a true dependency; counts/loss accumulate across tiles.
            dimension_semantics=("arbitrary", "arbitrary")),
    )(n_smem, logits_pad, target_pad)
    return out[0, 0]


def ghmc_reference(pred, target, bins=BINS):
    """Plain-JAX reference mirroring the PyTorch module (for validation)."""
    p = jax.nn.softmax(pred.astype(jnp.float32), axis=1)[:, 0]
    t = target.astype(jnp.float32)
    g = jnp.abs(p - t)
    tot = jnp.float32(p.shape[0])
    weights = jnp.zeros_like(p)
    n_valid = jnp.float32(0.0)
    for i in range(bins):
        lo = jnp.float32(i) / bins
        hi = jnp.float32(i + 1) / bins
        inds = (g >= lo) & (g < hi)
        num = jnp.sum(inds.astype(jnp.float32))
        has = num > 0
        weights = jnp.where(inds & has, tot / jnp.maximum(num, 1.0), weights)
        n_valid = n_valid + jnp.where(has, 1.0, 0.0)
    weights = jnp.where(n_valid > 0, weights / jnp.maximum(n_valid, 1.0), weights)
    log_p = jnp.maximum(jnp.log(p), -100.0)
    log_1mp = jnp.maximum(jnp.log(1.0 - p), -100.0)
    bce = -(t * log_p + (1.0 - t) * log_1mp)
    return jnp.sum(weights * bce) / tot


if __name__ == "__main__":
    key = jax.random.PRNGKey(0)
    k1, k2, k3, k4 = jax.random.split(key, 4)

    # Small (batch, num_classes) logits, consistent with the module.
    N, C = 8, 4
    pred = jax.random.normal(k1, (N, C), dtype=jnp.float32)
    target = jax.random.bernoulli(k2, 0.5, (N,)).astype(jnp.float32)
    loss = jax.block_until_ready(ghmc_loss(pred, target))
    ref = jax.block_until_ready(ghmc_reference(pred, target))
    assert jnp.isfinite(loss), "loss is not finite"
    # rtol loosened vs 1e-4: approx EUP reciprocals on w_bin / final scale.
    assert jnp.allclose(loss, ref, rtol=2e-3, atol=1e-6), (loss, ref)

    # Second batch exercising the multi-tile two-phase grid path (grid=(2, 2)).
    N2, C2 = 700, 4
    pred2 = jax.random.normal(k3, (N2, C2), dtype=jnp.float32)
    target2 = jax.random.bernoulli(k4, 0.5, (N2,)).astype(jnp.float32)
    loss2 = jax.block_until_ready(ghmc_loss(pred2, target2))
    ref2 = jax.block_until_ready(ghmc_reference(pred2, target2))
    assert jnp.isfinite(loss2), "loss2 is not finite"
    assert jnp.allclose(loss2, ref2, rtol=2e-3, atol=1e-6), (loss2, ref2)

    print("KERNEL_OK")
</pallas_src>

<mosaic_0001>
module attributes {stable_mosaic.version = 11 : i64} {
  func.func @ghmc_kernel(%arg0: i32, %arg1: i32, %arg2: memref<1xi32, #tpu.memory_space<smem>>, %arg3: memref<8x128xf32, #tpu.memory_space<vmem>>, %arg4: memref<1x128xf32, #tpu.memory_space<vmem>>, %arg5: memref<1x1xf32, #tpu.memory_space<vmem>>, %arg6: memref<16x1xf32, #tpu.memory_space<vmem>>, %arg7: memref<1x1xf32, #tpu.memory_space<vmem>>) attributes {dimension_semantics = [#tpu.dimension_semantics<arbitrary>, #tpu.dimension_semantics<arbitrary>], iteration_bounds = array<i64: 2, 1>, scalar_prefetch = 1 : i64, scratch_operands = 2 : i64, tpu.core_type = #tpu.core_type<tc>, window_params = [{transform_indices = @transform_0, window_bounds = array<i64: 8, 128>}, {transform_indices = @transform_1, window_bounds = array<i64: 1, 128>}, {pipeline_mode = #tpu.pipeline_mode<synchronous>, transform_indices = @transform_2, window_bounds = array<i64: 1, 1>}]} {
    %c0_i32 = arith.constant 0 : i32
    %0 = arith.cmpi eq, %arg0, %c0_i32 : i32
    %c0_i32_0 = arith.constant 0 : i32
    %1 = arith.cmpi eq, %arg1, %c0_i32_0 : i32
    %2 = arith.andi %0, %1 : i1
    %3 = arith.extui %2 : i1 to i32
    %c0_i32_1 = arith.constant 0 : i32
    %4 = arith.cmpi ne, %3, %c0_i32_1 : i32
    scf.if %4 {
      %cst_11 = arith.constant 0.000000e+00 : f32
      %35 = vector.broadcast %cst_11 : f32 to vector<16x1xf32>
      %c0_12 = arith.constant 0 : index
      %c0_13 = arith.constant 0 : index
      %36 = vector.load %arg6[%c0_12, %c0_13] : memref<16x1xf32, #tpu.memory_space<vmem>>, vector<16x1xf32>
      tpu.vector_store %arg6[%c0_12, %c0_13], %35 {strides = array<i32>} : memref<16x1xf32, #tpu.memory_space<vmem>>, vector<16x1xf32>,
      %cst_14 = arith.constant 0.000000e+00 : f32
      %37 = vector.broadcast %cst_14 : f32 to vector<1x1xf32>
      %c0_15 = arith.constant 0 : index
      %c0_16 = arith.constant 0 : index
      %38 = vector.load %arg7[%c0_15, %c0_16] : memref<1x1xf32, #tpu.memory_space<vmem>>, vector<1x1xf32>
      tpu.vector_store %arg7[%c0_15, %c0_16], %37 {strides = array<i32>} : memref<1x1xf32, #tpu.memory_space<vmem>>, vector<1x1xf32>,
      %cst_17 = arith.constant 0.000000e+00 : f32
      %39 = vector.broadcast %cst_17 : f32 to vector<1x1xf32>
      %c0_18 = arith.constant 0 : index
      %c0_19 = arith.constant 0 : index
      %40 = vector.load %arg5[%c0_18, %c0_19] : memref<1x1xf32, #tpu.memory_space<vmem>>, vector<1x1xf32>
      tpu.vector_store %arg5[%c0_18, %c0_19], %39 {strides = array<i32>} : memref<1x1xf32, #tpu.memory_space<vmem>>, vector<1x1xf32>,
    } else {
    }
    %c0 = arith.constant 0 : index
    %c0_2 = arith.constant 0 : index
    %5 = vector.load %arg3[%c0, %c0_2] : memref<8x128xf32, #tpu.memory_space<vmem>>, vector<8x128xf32>
    %c0_3 = arith.constant 0 : index
    %c0_4 = arith.constant 0 : index
    %6 = vector.load %arg4[%c0_3, %c0_4] : memref<1x128xf32, #tpu.memory_space<vmem>>, vector<1x128xf32>
    %cst = arith.constant dense<0xFF800000> : vector<128xf32>
    %7 = vector.multi_reduction <maximumf>, %5, %cst [0] : vector<8x128xf32> to vector<128xf32>
    %8 = vector.shape_cast %7 : vector<128xf32> to vector<1x128xf32>
    %9 = vector.broadcast %8 : vector<1x128xf32> to vector<8x128xf32>
    %10 = arith.subf %5, %9 : vector<8x128xf32>
    %11 = math.exp %10 : vector<8x128xf32>
    %cst_5 = arith.constant dense<0.000000e+00> : vector<128xf32>
    %12 = vector.multi_reduction <add>, %11, %cst_5 [0] : vector<8x128xf32> to vector<128xf32>
    %13 = vector.shape_cast %12 : vector<128xf32> to vector<1x128xf32>
    %14 = tpu.reciprocal %13 : vector<1x128xf32> -> vector<1x128xf32>
    %15 = vector.extract_strided_slice %11 {offsets = [0, 0], sizes = [1, 128], strides = [1, 1]} : vector<8x128xf32> to vector<1x128xf32>
    %16 = arith.mulf %15, %14 : vector<1x128xf32>
    %cst_6 = arith.constant 1.000000e+00 : f32
    %17 = vector.broadcast %cst_6 : f32 to vector<1x128xf32>
    %18 = arith.minimumf %16, %17 : vector<1x128xf32>
    %19 = arith.subf %18, %6 : vector<1x128xf32>
    %20 = math.absf %19 : vector<1x128xf32>
    %21 = tpu.iota {dimensions = array<i32: 0>} : vector<16x128xi32>
    %cst_7 = arith.constant 1.000000e+01 : f32
    %22 = vector.broadcast %cst_7 : f32 to vector<1x128xf32>
    %23 = arith.mulf %20, %22 : vector<1x128xf32>
    %24 = arith.fptosi %23 : vector<1x128xf32> to vector<1x128xi32>
    %25 = vector.broadcast %24 : vector<1x128xi32> to vector<16x128xi32>
    %26 = arith.cmpi eq, %21, %25 : vector<16x128xi32>
    %27 = arith.extui %26 : vector<16x128xi1> to vector<16x128xi32>
    %28 = arith.sitofp %27 : vector<16x128xi32> to vector<16x128xf32>
    %c0_i32_8 = arith.constant 0 : i32
    %29 = arith.cmpi eq, %arg0, %c0_i32_8 : i32
    %30 = arith.extui %29 : i1 to i32
    %c0_i32_9 = arith.constant 0 : i32
    %31 = arith.cmpi ne, %30, %c0_i32_9 : i32
    scf.if %31 {
      %c0_11 = arith.constant 0 : index
      %c0_12 = arith.constant 0 : index
      %35 = vector.load %arg6[%c0_11, %c0_12] : memref<16x1xf32, #tpu.memory_space<vmem>>, vector<16x1xf32>
      %cst_13 = arith.constant dense<0.000000e+00> : vector<16xf32>
      %36 = vector.multi_reduction <add>, %28, %cst_13 [1] : vector<16x128xf32> to vector<16xf32>
      %37 = vector.shape_cast %36 : vector<16xf32> to vector<16x1xf32>
      %38 = arith.addf %35, %37 : vector<16x1xf32>
      %c0_14 = arith.constant 0 : index
      %c0_15 = arith.constant 0 : index
      %39 = vector.load %arg6[%c0_14, %c0_15] : memref<16x1xf32, #tpu.memory_space<vmem>>, vector<16x1xf32>
      tpu.vector_store %arg6[%c0_14, %c0_15], %38 {strides = array<i32>} : memref<16x1xf32, #tpu.memory_space<vmem>>, vector<16x1xf32>,
    } else {
    }
    %c1_i32 = arith.constant 1 : i32
    %32 = arith.cmpi eq, %arg0, %c1_i32 : i32
    %33 = arith.extui %32 : i1 to i32
    %c0_i32_10 = arith.constant 0 : i32
    %34 = arith.cmpi ne, %33, %c0_i32_10 : i32
    scf.if %34 {
      %c0_11 = arith.constant 0 : index
      %35 = memref.load %arg2[%c0_11] : memref<1xi32, #tpu.memory_space<smem>>
      %36 = arith.sitofp %35 : i32 to f32
      %c0_12 = arith.constant 0 : index
      %c0_13 = arith.constant 0 : index
      %37 = vector.load %arg6[%c0_12, %c0_13] : memref<16x1xf32, #tpu.memory_space<vmem>>, vector<16x1xf32>
      %38 = tpu.iota {dimensions = array<i32: 0>} : vector<16x1xi32>
      %cst_14 = arith.constant 0.000000e+00 : f32
      %39 = vector.broadcast %cst_14 : f32 to vector<16x1xf32>
      %40 = arith.cmpf ogt, %37, %39 : vector<16x1xf32>
      %c10_i32 = arith.constant 10 : i32
      %41 = vector.broadcast %c10_i32 : i32 to vector<16x1xi32>
      %42 = arith.cmpi slt, %38, %41 : vector<16x1xi32>
      %43 = arith.andi %40, %42 : vector<16x1xi1>
      %cst_15 = arith.constant 1.000000e+00 : f32
      %44 = vector.broadcast %cst_15 : f32 to vector<16x1xf32>
      %45 = arith.maximumf %37, %44 : vector<16x1xf32>
      %46 = tpu.reciprocal %45 {approx = true} : vector<16x1xf32> -> vector<16x1xf32>
      %47 = vector.broadcast %36 : f32 to vector<16x1xf32>
      %48 = arith.mulf %47, %46 : vector<16x1xf32>
      %cst_16 = arith.constant 0.000000e+00 : f32
      %49 = vector.broadcast %cst_16 : f32 to vector<16x1xf32>
      %50 = arith.select %43, %48, %49 : vector<16x1xi1>, vector<16x1xf32>
      %51 = arith.extui %43 : vector<16x1xi1> to vector<16x1xi32>
      %52 = arith.sitofp %51 : vector<16x1xi32> to vector<16x1xf32>
      %cst_17 = arith.constant dense<0.000000e+00> : vector<1xf32>
      %53 = vector.multi_reduction <add>, %52, %cst_17 [0] : vector<16x1xf32> to vector<1xf32>
      %54 = vector.shape_cast %53 : vector<1xf32> to vector<1x1xf32>
      %55 = vector.broadcast %50 : vector<16x1xf32> to vector<16x128xf32>
      %56 = arith.mulf %28, %55 : vector<16x128xf32>
      %cst_18 = arith.constant dense<0.000000e+00> : vector<128xf32>
      %57 = vector.multi_reduction <add>, %56, %cst_18 [0] : vector<16x128xf32> to vector<128xf32>
      %58 = vector.shape_cast %57 : vector<128xf32> to vector<1x128xf32>
      %59 = vector.extract_strided_slice %5 {offsets = [0, 0], sizes = [1, 128], strides = [1, 1]} : vector<8x128xf32> to vector<1x128xf32>
      %60 = arith.subf %59, %8 : vector<1x128xf32>
      %61 = math.log %13 : vector<1x128xf32>
      %62 = arith.subf %60, %61 : vector<1x128xf32>
      %cst_19 = arith.constant -1.000000e+02 : f32
      %63 = vector.broadcast %cst_19 : f32 to vector<1x128xf32>
      %64 = arith.maximumf %62, %63 : vector<1x128xf32>
      %cst_20 = arith.constant 1.000000e+00 : f32
      %65 = vector.broadcast %cst_20 : f32 to vector<1x128xf32>
      %66 = arith.subf %65, %18 : vector<1x128xf32>
      %67 = math.log %66 : vector<1x128xf32>
      %cst_21 = arith.constant -1.000000e+02 : f32
      %68 = vector.broadcast %cst_21 : f32 to vector<1x128xf32>
      %69 = arith.maximumf %67, %68 : vector<1x128xf32>
      %70 = arith.mulf %6, %64 : vector<1x128xf32>
      %cst_22 = arith.constant 1.000000e+00 : f32
      %71 = vector.broadcast %cst_22 : f32 to vector<1x128xf32>
      %72 = arith.subf %71, %6 : vector<1x128xf32>
      %73 = arith.mulf %72, %69 : vector<1x128xf32>
      %74 = arith.addf %70, %73 : vector<1x128xf32>
      %cst_23 = arith.constant 0.000000e+00 : f32
      %75 = vector.broadcast %cst_23 : f32 to vector<1x128xf32>
      %76 = arith.subf %75, %74 : vector<1x128xf32>
      %c0_24 = arith.constant 0 : index
      %c0_25 = arith.constant 0 : index
      %77 = vector.load %arg7[%c0_24, %c0_25] : memref<1x1xf32, #tpu.memory_space<vmem>>, vector<1x1xf32>
      %78 = arith.mulf %58, %76 : vector<1x128xf32>
      %79 = vector.shape_cast %78 : vector<1x128xf32> to vector<1x1x128xf32>
      %cst_26 = arith.constant dense<0.000000e+00> : vector<1xf32>
      %80 = vector.multi_reduction <add>, %79, %cst_26 [1, 2] : vector<1x1x128xf32> to vector<1xf32>
      %81 = vector.shape_cast %80 : vector<1xf32> to vector<1x1x1xf32>
      %82 = vector.extract %81[0, 0, 0] : f32 from vector<1x1x1xf32>
      %83 = vector.broadcast %82 : f32 to vector<1x1xf32>
      %84 = arith.addf %77, %83 : vector<1x1xf32>
      %c0_27 = arith.constant 0 : index
      %c0_28 = arith.constant 0 : index
      %85 = vector.load %arg7[%c0_27, %c0_28] : memref<1x1xf32, #tpu.memory_space<vmem>>, vector<1x1xf32>
      tpu.vector_store %arg7[%c0_27, %c0_28], %84 {strides = array<i32>} : memref<1x1xf32, #tpu.memory_space<vmem>>, vector<1x1xf32>,
      %cst_29 = arith.constant 1.000000e+00 : f32
      %86 = vector.broadcast %cst_29 : f32 to vector<1x1xf32>
      %87 = arith.maximumf %54, %86 : vector<1x1xf32>
      %88 = vector.broadcast %36 : f32 to vector<1x1xf32>
      %89 = arith.mulf %87, %88 : vector<1x1xf32>
      %90 = tpu.reciprocal %89 {approx = true} : vector<1x1xf32> -> vector<1x1xf32>
      %91 = arith.mulf %84, %90 : vector<1x1xf32>
      %c0_30 = arith.constant 0 : index
      %c0_31 = arith.constant 0 : index
      %92 = vector.load %arg5[%c0_30, %c0_31] : memref<1x1xf32, #tpu.memory_space<vmem>>, vector<1x1xf32>
      tpu.vector_store %arg5[%c0_30, %c0_31], %91 {strides = array<i32>} : memref<1x1xf32, #tpu.memory_space<vmem>>, vector<1x1xf32>,
    } else {
    }
    return
  }
  func.func @transform_0(%arg0: i32, %arg1: i32, %arg2: memref<1xi32, #tpu.memory_space<smem>>) -> (i32, i32) {
    %c0_i32 = arith.constant 0 : i32
    %c0_i32_0 = arith.constant 0 : i32
    return %c0_i32, %arg1 : i32, i32
  }
  func.func @transform_1(%arg0: i32, %arg1: i32, %arg2: memref<1xi32, #tpu.memory_space<smem>>) -> (i32, i32) {
    %c0_i32 = arith.constant 0 : i32
    %c0_i32_0 = arith.constant 0 : i32
    return %c0_i32, %arg1 : i32, i32
  }
  func.func @transform_2(%arg0: i32, %arg1: i32, %arg2: memref<1xi32, #tpu.memory_space<smem>>) -> (i32, i32) {
    %c0_i32 = arith.constant 0 : i32
    %c0_i32_0 = arith.constant 0 : i32
    %c0_i32_1 = arith.constant 0 : i32
    return %c0_i32, %c0_i32_0 : i32, i32
  }
}

</mosaic_0001>

<llo_original>
// kernel: ghmc_loss.1
$region0: #{ghmc_loss.1}
  #allocation0 [shape = 'u32[]', space=smem, size = 0x4, offset = 0x4, fixed_abs, tag = 'smem constant byte address 0x4 - core index']
  #allocation1 [shape = 'u32[144,128]{1,0:T(1,128)}', space=vmem, size = 0x12000, scoped, tag = 'internal scratch']
  #allocation2 [shape = 'f32[16,1]{1,0:T(8,128)}', space=vmem, size = 0x2000, scoped, tag = 'scratch operand']
  #allocation3 [shape = 'f32[1,1]{1,0:T(1,128)}', space=vmem, size = 0x200, scoped, tag = 'scratch operand']
  #allocation4 [shape = 's32[1]{0}', space=sflag, size = 0x4, scoped, tag = 'scoped memory for ghmc_loss.1']
  #allocation5 [shape = 's32[1]{0:T(128)S(6)}', space=smem, size = 0x200, scoped, tag = 'prefetched SMEM operand 0']
  %s0 = inlined_call_operand.<no memory space> [shape: s32[1], index: 0, kind: input, shape index: {}]
  %s1 = inlined_call_operand.vmem [shape: f32[8,128], index: 1, kind: input, shape index: {}]
  %s2 = inlined_call_operand.vmem [shape: f32[1,128], index: 2, kind: input, shape index: {}]
  %s3 = inlined_call_operand.hbm [shape: f32[1,1], index: 3, kind: output, shape index: {}]
  %s4 = sld [smem:[#allocation0]]
  $region53: #{ghmc_loss.1} parent=0
    _
  %s6 = ssub.s32 1, %s4
  %s7 = scalar_select 0, %s6, %s4
  %8 = sst [smem:[#allocation5]] %s0
  $region1: #{ghmc_loss.1} parent=0
    #allocation6 [shape = 'u8[512]{0}', space=vmem, size = 0x400, scoped, tag = 'output window, operand 0, single buffered']
    #allocation7 [shape = 's32[2]{0}', space=sflag, size = 0x8, scoped, tag = 'scoped memory for ghmc_loss.1']
    %9 = vsyncpa [#allocation7], 0
    loop: start=0, step=1, limit=4
    $region2: #{ghmc_loss.1} parent=1 // loop_pre_header
      _
    $region3: #{ghmc_loss.1} parent=1 // loop_header
      %s11 = sphi 0, %s15
      %p12 = scmp.ge.s32.totalorder %s11, 4
      %s18 = sphi 0, %s30
      %s19 = sphi 0, %s26
      %s20 = sphi 0, %s18
      %s21 = sphi 0, %s19
      %s22 = sphi 0, %s20
      %s23 = sphi 0, %s21
      %s33 = sphi 0, %s35
      %s36 = sphi 0, %s33
      %s37 = sphi 0, %s36
      %s53 = sphi 0, %s37
      %s59 = sphi 0, %s61
      %s62 = sphi 0, %s59
      %s63 = sphi 0, %s62
      %s79 = sphi 0, %s63
      %s83 = sphi 0, %s83
      %s85 = sphi 0, %s83
      %s86 = sphi 0, %s85
      %s100 = sphi 0, %s86
    $region4: #{ghmc_loss.1} parent=1 // loop_header_branch
      %14 = sbr.rel (%p12) target = $region8
    $region5: #{ghmc_loss.1} parent=1 // loop_body
      %s16 = ssub.s32 %s11, 1
      %s17 = ssub.s32 %s11, 2
      %s24 = sadd.s32 1, %s19
      %p25 = scmp.ge.s32.totalorder %s24, 1
      %s26 = scalar_select %p25, 0, %s24
      %s27 = sadd.s32 1, %s18
      %s28 = scalar_select %p25, %s27, %s18
      %p29 = scmp.ge.s32.totalorder %s28, 2
      %s30 = scalar_select %p29, 0, %s28
      %s31 = ssub.s32 %s19, %s26
      %p32 = scmp.eq.s32.totalorder %s31, 0
      %s34 = sadd.s32 %s33, 1
      %s35 = scalar_select %p32, %s33, %s34
      %p38 = pneg %p32
      %p39 = scmp.eq.s32.totalorder %s11, 1
      %p40 = por %p38, %p39
      %p41 = scmp.ne.s32.totalorder %s33, %s36
      %p42 = scmp.eq.s32.totalorder %s11, 0
      %p43 = por %p41, %p42
      %p44 = scmp.ne.s32.totalorder %s33, %s36
      %p45 = scmp.eq.s32.totalorder %s16, 1
      %p46 = por %p44, %p45
      %p47 = scmp.ne.s32.totalorder %s36, %s37
      %p48 = scmp.eq.s32.totalorder %s16, 0
      %p49 = por %p47, %p48
      %p50 = scmp.ne.s32.totalorder %s36, %s37
      %p51 = scmp.eq.s32.totalorder %s17, 1
      %p52 = por %p50, %p51
      %p54 = scmp.ne.s32.totalorder %s37, %s53
      %p55 = scmp.eq.s32.totalorder %s17, 0
      %p56 = por %p54, %p55
      %s57 = ssub.s32 %s19, %s26
      %p58 = scmp.eq.s32.totalorder %s57, 0
      %s60 = sadd.s32 %s59, 1
      %s61 = scalar_select %p58, %s59, %s60
      %p64 = pneg %p58
      %p65 = scmp.eq.s32.totalorder %s11, 1
      %p66 = por %p64, %p65
      %p67 = scmp.ne.s32.totalorder %s59, %s62
      %p68 = scmp.eq.s32.totalorder %s11, 0
      %p69 = por %p67, %p68
      %p70 = scmp.ne.s32.totalorder %s59, %s62
      %p71 = scmp.eq.s32.totalorder %s16, 1
      %p72 = por %p70, %p71
      %p73 = scmp.ne.s32.totalorder %s62, %s63
      %p74 = scmp.eq.s32.totalorder %s16, 0
      %p75 = por %p73, %p74
      %p76 = scmp.ne.s32.totalorder %s62, %s63
      %p77 = scmp.eq.s32.totalorder %s17, 1
      %p78 = por %p76, %p77
      %p80 = scmp.ne.s32.totalorder %s63, %s79
      %p81 = scmp.eq.s32.totalorder %s17, 0
      %p82 = por %p80, %p81
      %s84 = sadd.s32 %s83, 1
      %p87 = scmp.eq.s32.totalorder %s11, 1
      %p88 = scmp.ne.s32.totalorder %s83, %s85
      %p89 = scmp.eq.s32.totalorder %s11, 0
      %p90 = por %p88, %p89
      %p91 = scmp.ne.s32.totalorder %s83, %s85
      %p92 = scmp.eq.s32.totalorder %s16, 1
      %p93 = por %p91, %p92
      %p94 = scmp.ne.s32.totalorder %s85, %s86
      %p95 = scmp.eq.s32.totalorder %s16, 0
      %p96 = por %p94, %p95
      %p97 = scmp.ne.s32.totalorder %s85, %s86
      %p98 = scmp.eq.s32.totalorder %s17, 1
      %p99 = por %p97, %p98
      %p101 = scmp.ne.s32.totalorder %s86, %s100
      %p102 = scmp.eq.s32.totalorder %s17, 0
      %p103 = por %p101, %p102
      %p104 = scmp.le.s32.totalorder 1, %s11
      %p105 = scmp.lt.s32.totalorder %s11, 3
      %p106 = pnand %p104, %p105
      %p107 = pneg %p106
      // Predicated region
      $region9: #{ghmc_loss.1} parent=5 // pred_check
        _
      $region10: #{ghmc_loss.1} parent=5 // pred_check_branch
        %109 = sbr.rel (%p106) target = $region12
      $region11: #{ghmc_loss.1} parent=5 // pred_region
        %s110 = ssub.s32 %s11, 1
        // Predicated region
        $region13: #{ghmc_loss.1} parent=11 // pred_check
          %p111 = pneg %p49
        $region14: #{ghmc_loss.1} parent=11 // pred_check_branch
          %113 = sbr.rel (%p111) target = $region16
        $region15: #{ghmc_loss.1} parent=11 // pred_region
          %p114 = scmp.lt.s32.totalorder %s21, 0
          %s115 = scalar_select %p114, %s21, 0
          %s116 = smul.addr %s115, 8
          %s117 = scalar_lea.vmem %s1, %s116
        $region16: #{ghmc_loss.1} parent=11 // pred_fallthru
          _
        // Predicated region
        $region17: #{ghmc_loss.1} parent=11 // pred_check
          %p118 = pneg %p75
        $region18: #{ghmc_loss.1} parent=11 // pred_check_branch
          %120 = sbr.rel (%p118) target = $region20
        $region19: #{ghmc_loss.1} parent=11 // pred_region
          %p121 = scmp.lt.s32.totalorder %s21, 0
          %s122 = scalar_select %p121, %s21, 0
          %s123 = scalar_lea.vmem %s2, %s122
        $region20: #{ghmc_loss.1} parent=11 // pred_fallthru
          _
      $region12: #{ghmc_loss.1} parent=5 // pred_fallthru
        _
      %p124 = scmp.lt.s32.totalorder %s11, 2
      // Predicated region
      $region21: #{ghmc_loss.1} parent=5 // pred_check
        %p125 = pneg %p124
      $region22: #{ghmc_loss.1} parent=5 // pred_check_branch
        %127 = sbr.rel (%p125) target = $region24
      $region23: #{ghmc_loss.1} parent=5 // pred_region
        _
      $region24: #{ghmc_loss.1} parent=5 // pred_fallthru
        _
      %p128 = scmp.le.s32.totalorder 1, %s11
      %p129 = scmp.lt.s32.totalorder %s11, 3
      %p130 = pnand %p128, %p129
      %p131 = pneg %p130
      // Predicated region
      $region25: #{ghmc_loss.1} parent=5 // pred_check
        _
      $region26: #{ghmc_loss.1} parent=5 // pred_check_branch
        %133 = sbr.rel (%p130) target = $region28
      $region27: #{ghmc_loss.1} parent=5 // pred_region
        %s134 = ssub.s32 %s11, 1
        %p135 = scmp.lt.s32.totalorder %s21, 0
        %s136 = scalar_select %p135, %s21, 0
        %s137 = smul.addr %s136, 8
        %s138 = scalar_lea.vmem %s1, %s137
        %p139 = pneg %p49
        %p140 = pneg %p46
        %p141 = scmp.lt.s32.totalorder %s21, 0
        %s142 = scalar_select %p141, %s21, 0
        %s143 = scalar_lea.vmem %s2, %s142
        %p144 = pneg %p75
        %p145 = pneg %p72
        %p146 = pneg %p96
        %p147 = pneg %p93
        %p148 = scmp.lt.s32.totalorder %s21, 0
        %s149 = scalar_select %p148, %s21, 0
        %s150 = smul.addr %s149, 8
        %s151 = scalar_lea.vmem %s1, %s150
        %p152 = scmp.lt.s32.totalorder %s21, 0
        %s153 = scalar_select %p152, %s21, 0
        %s154 = scalar_lea.vmem %s2, %s153
        %p155 = scmp.eq.s32.totalorder %s20, 0
        %p156 = scmp.eq.s32.totalorder %s21, 0
        %p157 = pnand %p155, %p156
        %p158 = pneg %p157
        // Predicated region
        $region29: #{ghmc_loss.1} parent=27 // pred_check
          _
        $region30: #{ghmc_loss.1} parent=27 // pred_check_branch
          %160 = sbr.rel (%p157) target = $region32
        $region31: #{ghmc_loss.1} parent=27 // pred_region
          %vm161 = vcmask 7168
          %162 = vst.msk [vmem:[#allocation2] sm:$0xff] %vm161, 0.0
          %163 = vst.msk [vmem:[#allocation2 + $0x8] sm:$0xff] %vm161, 0.0
          %vm164 = vcmask 0
          %165 = vst.msk [vmem:[#allocation3] sm:$0x1] %vm164, 0.0
          %166 = vst.msk [vmem:[#allocation6] sm:$0x1] %vm164, 0.0
        $region32: #{ghmc_loss.1} parent=27 // pred_fallthru
          _
        %v167 = vld [vmem:[%s151] sm:$0xff]
        %v168 = vld [vmem:[%s154] sm:$0x1]
        %v169 = vrot.slane %v167, 4
        %v170 = vmax.f32 %v167, %v169
        %v171 = vrot.slane %v170, 2
        %v172 = vmax.f32 %v170, %v171
        %v173 = vrot.slane %v172, 1
        %v174 = vmax.f32 %v172, %v173
        %v175 = vsub.f32 %v167, %v174
        %v176 = vmul.f32 %v175, 1.442695
        %v177 = vpow.pop %v176
        %v178 = vrot.slane %v177, 4
        %v179 = vadd.f32 %v177, %v178
        %v180 = vrot.slane %v179, 2
        %v181 = vadd.f32 %v179, %v180
        %v182 = vrot.slane %v181, 1
        %v183 = vadd.f32 %v181, %v182
        %v184 = vrcp.pop %v183
        %v185 = vmul.f32 %v177, %v184
        %v186 = vmin.f32 %v185, 1.0
        %v187 = vsub.f32 %v186, %v168
        %v188 = vand.u32 2147483647, %v187
        %v189 = vlaneseq
        %v190 = vshrl.u32 %v189, 7
        %v191 = vadd.s32 %v190, 8
        %v192 = vmul.f32 %v188, 10.0
        %v193 = vcvt.f32.s32.to.zero.pseudo %v192
        %v194 = vlaneseq
        %v195 = vshrl.u32 %v194, 7
        %v196 = vsub.s32 0, %v195
        %v197 = vrot.slane %v193, %v196
        %vm198 = vcmp.eq.s32.totalorder %v190, %v197
        %vm199 = vcmp.eq.s32.totalorder %v191, %v197
        %v200 = vsel %vm198, 1, 0
        %v201 = vsel %vm199, 1, 0
        %v202 = vcvt.s32.f32 %v200
        %v203 = vcvt.s32.f32 %v201
        // Predicated region
        $region33: #{ghmc_loss.1} parent=27 // pred_check
          %p204 = pneg %p155
        $region34: #{ghmc_loss.1} parent=27 // pred_check_branch
          %206 = sbr.rel (%p204) target = $region36
        $region35: #{ghmc_loss.1} parent=27 // pred_region
          %v207 = vld [vmem:[#allocation2] sm:$0xff]
          %v208 = vld [vmem:[#allocation2 + $0x8] sm:$0xff]
          %209 = vadd.xlane.f32.xlu0 %v202
          %v210 = vpop.xlane.xlu0 %209
          %211 = vadd.xlane.f32.xlu0 %v203
          %v212 = vpop.xlane.xlu0 %211
          %v213 = vadd.f32 %v207, %v210
          %v214 = vadd.f32 %v208, %v212
          %vm215 = vcmask 7168
          %216 = vst.msk [vmem:[#allocation2] sm:$0xff] %vm215, %v213
          %217 = vst.msk [vmem:[#allocation2 + $0x8] sm:$0xff] %vm215, %v214
        $region36: #{ghmc_loss.1} parent=27 // pred_fallthru
          _
        %p218 = scmp.eq.s32.totalorder %s20, 1
        // Predicated region
        $region37: #{ghmc_loss.1} parent=27 // pred_check
          %p219 = pneg %p218
        $region38: #{ghmc_loss.1} parent=27 // pred_check_branch
          %221 = sbr.rel (%p219) target = $region40
        $region39: #{ghmc_loss.1} parent=27 // pred_region
          %s222 = sld [smem:[#allocation5]]
          %s223 = scvt.s32.f32 %s222
          %v224 = vld [vmem:[#allocation2] sm:$0xff]
          %v225 = vld [vmem:[#allocation2 + $0x8] sm:$0xff]
          %vm226 = vcmp.gt.f32.partialorder %v224, 0.0
          %vm227 = vcmp.gt.f32.partialorder %v225, 0.0
          %vm228 = vcmp.lt.s32.totalorder %v190, 10
          %vm229 = vcmp.lt.s32.totalorder %v191, 10
          %vm230 = vmand %vm226, %vm228
          %vm231 = vmand %vm227, %vm229
          %v232 = vmax.f32 %v224, 1.0
          %v233 = vmax.f32 %v225, 1.0
          %v234 = vrcp.pop %v232
          %v235 = vrcp.pop %v233
          %v236 = vstv %s223
          %v237 = vmul.f32 %v236, %v234
          %v238 = vmul.f32 %v236, %v235
          %v239 = vsel %vm230, %v237, 0.0
          %v240 = vsel %vm231, %v238, 0.0
          %v241 = vsel %vm230, 1, 0
          %v242 = vsel %vm231, 1, 0
          %v243 = vcvt.s32.f32 %v241
          %v244 = vcvt.s32.f32 %v242
          %vm245 = vcmask 7168
          %v246 = vsel %vm245, %v243, 0.0
          %v247 = vsel %vm245, %v244, 0.0
          %v248 = vadd.f32 %v246, %v247
          %v249 = vrot.slane %v248, 4
          %v250 = vadd.f32 %v248, %v249
          %v251 = vrot.slane %v250, 2
          %v252 = vadd.f32 %v250, %v251
          %v253 = vrot.slane %v252, 1
          %v254 = vadd.f32 %v252, %v253
          %256 = vset.pattern.permute.xlu0 0
          %257 = vperm.xlu0 %256, %v239
          %v258 = vpop.permute.xlu0 %257
          %261 = vset.pattern.permute.xlu0 0
          %262 = vperm.xlu0 %261, %v240
          %v263 = vpop.permute.xlu0 %262
          %v265 = vmul.f32 %v202, %v258
          %v266 = vmul.f32 %v203, %v263
          %v267 = vadd.f32 %v265, %v266
          %v268 = vrot.slane %v267, 4
          %v269 = vadd.f32 %v267, %v268
          %v270 = vrot.slane %v269, 2
          %v271 = vadd.f32 %v269, %v270
          %v272 = vrot.slane %v271, 1
          %v273 = vadd.f32 %v271, %v272
          %v274 = vlog2.pop %v183
          %v275 = vmul.f32 %v274, 0.6931472
          %v276 = vsub.f32 %v175, %v275
          %v277 = vmax.f32 %v276, -100.0
          %v278 = vsub.f32 1.0, %v186
          %v279 = vlog2.pop %v278
          %v280 = vmul.f32 %v279, 0.6931472
          %v281 = vmax.f32 %v280, -100.0
          %v282 = vmul.f32 %v168, %v277
          %v283 = vsub.f32 1.0, %v168
          %v284 = vmul.f32 %v283, %v281
          %v285 = vadd.f32 %v282, %v284
          %v286 = vsub.f32 0.0, %v285
          %v287 = vld [vmem:[#allocation3] sm:$0x1]
          %v288 = vmul.f32 %v273, %v286
          %vm289 = vcmask 1040384
          %v290 = vsel %vm289, %v288, 0.0
          %291 = vadd.xlane.f32.xlu0 %v290
          %v292 = vpop.xlane.xlu0 %291
          %v293 = vrot.slane %v292, 4
          %v294 = vadd.f32 %v292, %v293
          %v295 = vrot.slane %v294, 2
          %v296 = vadd.f32 %v294, %v295
          %v297 = vrot.slane %v296, 1
          %v298 = vadd.f32 %v296, %v297
          %s299 = vtos %v298
          %v300 = vstv %s299
          %v301 = vadd.f32 %v287, %v300
          %vm302 = vcmask 0
          %303 = vst.msk [vmem:[#allocation3] sm:$0x1] %vm302, %v301
          %v304 = vmax.f32 %v254, 1.0
          %v305 = vmul.f32 %v304, %v236
          %v306 = vrcp.pop %v305
          %v307 = vmul.f32 %v301, %v306
          %308 = vst.msk [vmem:[#allocation6] sm:$0x1] %vm302, %v307
        $region40: #{ghmc_loss.1} parent=27 // pred_fallthru
          _
        // Predicated region
        $region41: #{ghmc_loss.1} parent=27 // pred_check
          %p309 = pneg %p93
        $region42: #{ghmc_loss.1} parent=27 // pred_check_branch
          %311 = sbr.rel (%p309) target = $region44
        $region43: #{ghmc_loss.1} parent=27 // pred_region
          %s313 = ssub.s32 16, 16
          %314 = vsyncadd [#allocation7], %s313
          %s316 = sshll.u32 [#allocation6], 4
          %s317 = int_to_ptr.vmem [resolvable:$true] %s316
          %319 = dma.vmem_to_hbm [thread:$0]  %s317, 16, %s3, [#allocation7]
        $region44: #{ghmc_loss.1} parent=27 // pred_fallthru
          _
        // Predicated region
        $region45: #{ghmc_loss.1} parent=27 // pred_check
          %p320 = pneg %p93
        $region46: #{ghmc_loss.1} parent=27 // pred_check_branch
          %322 = sbr.rel (%p320) target = $region48
        $region47: #{ghmc_loss.1} parent=27 // pred_region
          %323 = dma.done [#allocation7], 16
        $region48: #{ghmc_loss.1} parent=27 // pred_fallthru
          _
      $region28: #{ghmc_loss.1} parent=5 // pred_fallthru
        _
      %p324 = scmp.le.s32.totalorder 2, %s11
      // Predicated region
      $region49: #{ghmc_loss.1} parent=5 // pred_check
        %p325 = pneg %p324
      $region50: #{ghmc_loss.1} parent=5 // pred_check_branch
        %327 = sbr.rel (%p325) target = $region52
      $region51: #{ghmc_loss.1} parent=5 // pred_region
        %s328 = ssub.s32 %s11, 2
      $region52: #{ghmc_loss.1} parent=5 // pred_fallthru
        _
    $region6: #{ghmc_loss.1} parent=1 // loop_footer
      %s15 = sadd.s32 1, %s11
    $region7: #{ghmc_loss.1} parent=1 // loop_footer_branch
      %10 = sbr.rel target = $region3
    $region8: #{ghmc_loss.1} parent=1 // loop_exit
      _
    %329 = vsyncpa [#allocation7], 1
    %s330 = scalar_lea.sflag [#allocation7], 1
    %331 = vsyncpa %s330, 1

</llo_original>
